<compile_context>
chip_gen: v6e
topology: v6e:2x2x1
jax: 0.10.0
libtpu: 0.0.40
codegen_flags: <defaults>
</compile_context>

<pallas_src>
import functools

import jax
import jax.numpy as jnp
from jax.experimental import pallas as pl
from jax.experimental.pallas import tpu as pltpu

LEAKY_SLOPE = 0.01
BN_EPS = 1e-5
LANE = 128
_TB_CAP = 1024          # max batch-tile rows


def _round_up(n, m):
    return ((n + m - 1) // m) * m


# ----------------------------- Pallas kernel -------------------------------
def classifier_kernel(x_ref, w_ref, c_ref, o_ref, *, n_layers):
    """Fused (Linear+BN folded) -> LeakyReLU chain, final Linear.

    x_ref : (TB, P)       bf16  activation tile (streamed per grid step)
    w_ref : (L, P, P)     bf16  folded weights (VMEM-resident, constant index)
    c_ref : (L, 1, P)     f32   folded bias / BN shifts
    o_ref : (TB, P)       bf16  output tile (streamed)
    """
    h = x_ref[...]                                           # bf16
    for i in range(n_layers - 1):
        z = jnp.dot(h, w_ref[i], preferred_element_type=jnp.float32) + c_ref[i]
        z = jnp.where(z >= 0.0, z, LEAKY_SLOPE * z)          # f32 VPU (v5e-safe)
        h = z.astype(jnp.bfloat16)                           # bf16 MXU input
    z = jnp.dot(h, w_ref[n_layers - 1],
                preferred_element_type=jnp.float32) + c_ref[n_layers - 1]
    o_ref[...] = z.astype(o_ref.dtype)


# ------------------------------ param setup ---------------------------------
def xavier_normal(key, fan_in, fan_out):
    std = jnp.sqrt(2.0 / (fan_in + fan_out))
    return jax.random.normal(key, (fan_in, fan_out), jnp.float32) * std


def make_params(key, dim_x, cat_idx, cat_dims, emb_size, n_hidden, dim_hidden,
                n_out):
    """Raw parameters mirroring the PyTorch module's init (eval mode)."""
    fc_input_dim = len(cat_idx) * emb_size + (dim_x - len(cat_idx))
    keys = jax.random.split(key, len(cat_dims) + n_hidden + 2)
    p = {}
    # Embedding tables: PyTorch default init N(0, 1)
    p["emb"] = [jax.random.normal(keys[i], (cat_dims[i], emb_size), jnp.float32)
                for i in range(len(cat_dims))]

    def bn():
        return dict(gamma=jnp.ones((dim_hidden,), jnp.float32),
                    beta=jnp.zeros((dim_hidden,), jnp.float32),
                    mean=jnp.zeros((dim_hidden,), jnp.float32),
                    var=jnp.ones((dim_hidden,), jnp.float32))

    p["w1"] = xavier_normal(keys[len(cat_dims)], fc_input_dim, dim_hidden)
    p["b1"] = jnp.zeros((dim_hidden,), jnp.float32)
    p["bn1"] = bn()
    p["wm"] = [xavier_normal(keys[len(cat_dims) + 1 + i], dim_hidden, dim_hidden)
               for i in range(n_hidden)]
    p["bm"] = [jnp.zeros((dim_hidden,), jnp.float32) for _ in range(n_hidden)]
    p["bnm"] = [bn() for _ in range(n_hidden)]
    p["wf"] = xavier_normal(keys[-1], dim_hidden, n_out)
    p["bf"] = jnp.zeros((n_out,), jnp.float32)
    return p


def _fold_linear_bn(w, b, bn):
    """y = BN(x @ w + b)  ==  x @ (w * s) + (b * s + beta - mean * s)."""
    s = bn["gamma"] / jnp.sqrt(bn["var"] + BN_EPS)
    return w * s[None, :], b * s + bn["beta"] - bn["mean"] * s


def _pad2(a, rows, cols):
    return jnp.pad(a, ((0, rows - a.shape[0]), (0, cols - a.shape[1])))


def fold_and_pad(params, n_hidden):
    """Fold bias+BN into the weights, pad every layer to a uniform (P, P)
    lane-dense tile and stack -> kernel sees 3 operands (x, W-stack, c-stack).

    Zero padding is exact: padded K columns contribute 0 to the dot products,
    padded hidden units get weight-column 0 and shift 0 -> activation 0
    (LeakyReLU(0)=0) -> contribute 0 downstream.
    """
    K, H = params["w1"].shape
    n_out = params["wf"].shape[1]
    P = max(_round_up(K, LANE), _round_up(H, LANE), _round_up(n_out, LANE))

    ws, cs = [], []
    w, c = _fold_linear_bn(params["w1"], params["b1"], params["bn1"])
    ws.append(_pad2(w, P, P)); cs.append(_pad2(c[None, :], 1, P))
    for i in range(n_hidden):
        w, c = _fold_linear_bn(params["wm"][i], params["bm"][i], params["bnm"][i])
        ws.append(_pad2(w, P, P)); cs.append(_pad2(c[None, :], 1, P))
    ws.append(_pad2(params["wf"], P, P))
    cs.append(_pad2(params["bf"][None, :], 1, P))

    w_stack = jnp.stack(ws, axis=0).astype(jnp.bfloat16)   # (L, P, P)
    c_stack = jnp.stack(cs, axis=0).astype(jnp.float32)    # (L, 1, P)
    return w_stack, c_stack, (K, P, n_out)


# ------------------------------ JAX wrapper ---------------------------------
def _choose_tb(b8):
    """Pick the batch tile TB (multiple of 8).

    Small batches: one lane-dense tile (no dead rows, no per-step overhead).
    Larger batches: >=2 grid steps (dual-TC on v7x), tiles capped at 1024 rows,
    sized so the last (possibly partial) tile over-hangs by only a few rows.
    """
    if b8 <= 512:
        return b8
    n_tiles = max(2, -(-b8 // _TB_CAP))
    return _round_up(-(-b8 // n_tiles), 8)


def make_classifier_forward(*, dim_x, cat_idx, n_hidden, dims):
    K, P, n_out = dims
    n_layers = n_hidden + 2
    non_cat = tuple(i for i in range(dim_x) if i not in cat_idx)
    kern = functools.partial(classifier_kernel, n_layers=n_layers)

    @jax.jit
    def forward(x, emb_tables, w_stack, c_stack):
        B = x.shape[0]

        # --- glue (fuses under jit): embedding gather + concat + lane pad ---
        # NB: jnp.take clamps out-of-range indices (PyTorch would error).
        cols = []
        for i, col in enumerate(cat_idx):
            idx = x[:, col].astype(jnp.int32)
            cols.append(jnp.take(emb_tables[i], idx, axis=0))
        cols.append(x[:, jnp.asarray(non_cat)])
        if P > K:   # fold the K -> P lane pad into the concat (no extra HBM pass)
            cols.append(jnp.zeros((B, P - K), jnp.float32))
        fc_in = jnp.concatenate(cols, axis=1).astype(jnp.bfloat16)   # (B, P)

        B8 = _round_up(B, 8)               # pad batch rows only (<= 7 rows)
        if B8 != B:
            fc_in = jnp.pad(fc_in, ((0, B8 - B), (0, 0)))

        TB = _choose_tb(B8)
        grid_b = pl.cdiv(B8, TB)           # last tile may hang off the edge:
                                           # OOB reads feed rows we slice off,
                                           # OOB writes are masked.

        flops = 2 * grid_b * TB * n_layers * P * P
        bytes_accessed = (2 * B8 * (P + P)          # bf16 act in/out streams
                          + n_layers * P * P * 2    # bf16 weights (resident)
                          + n_layers * P * 4)       # f32 shifts

        # VMEM: double-buffered bf16 act/out tiles + (constant-index) weight
        # stacks + f32 intermediate headroom; 2x safety, 16 MiB defensive
        # floor, capped at 48 MiB to leave headroom on v7x's 64 MiB VMEM.
        block_bytes = (2 * TB * P * 2 * 2
                       + 2 * (n_layers * P * P * 2 + n_layers * P * 4)
                       + 6 * TB * P * 4)
        vmem_limit = int(min(48 << 20, max(16 << 20, 2 * block_bytes)))

        out = pl.pallas_call(
            kern,
            out_shape=jax.ShapeDtypeStruct((B8, P), jnp.bfloat16),
            grid=(grid_b,),
            in_specs=[
                pl.BlockSpec((TB, P), lambda i: (i, 0)),               # activations
                pl.BlockSpec((n_layers, P, P), lambda i: (0, 0, 0)),   # weight stack
                pl.BlockSpec((n_layers, 1, P), lambda i: (0, 0, 0)),   # shift stack
            ],
            out_specs=pl.BlockSpec((TB, P), lambda i: (i, 0)),
            compiler_params=pltpu.CompilerParams(
                dimension_semantics=("parallel",),
                vmem_limit_bytes=vmem_limit),
            cost_estimate=pl.CostEstimate(
                flops=int(flops), transcendentals=0,
                bytes_accessed=int(bytes_accessed)),
        )(fc_in, w_stack, c_stack)

        return out[:B, :n_out].astype(jnp.float32)

    return forward


# Pure-JAX f32 reference (unfolded, unpadded) for a correctness sanity check.
def classifier_reference(x, params, *, dim_x, cat_idx, n_hidden):
    emb_list = []
    for i, col in enumerate(cat_idx):
        idx = x[:, col].astype(jnp.int32)
        emb_list.append(jnp.take(params["emb"][i], idx, axis=0))
    non_cat = [i for i in range(dim_x) if i not in cat_idx]
    h = jnp.concatenate(emb_list + [x[:, jnp.array(non_cat)]], axis=1)

    def layer(h, w, b, bn):
        z = jnp.dot(h, w, preferred_element_type=jnp.float32) + b
        s = bn["gamma"] / jnp.sqrt(bn["var"] + BN_EPS)
        z = (z - bn["mean"]) * s + bn["beta"]
        return jnp.where(z >= 0.0, z, LEAKY_SLOPE * z)

    h = layer(h, params["w1"], params["b1"], params["bn1"])
    for i in range(n_hidden):
        h = layer(h, params["wm"][i], params["bm"][i], params["bnm"][i])
    return jnp.dot(h, params["wf"], preferred_element_type=jnp.float32) + params["bf"]


def _make_input(key, B, dim_x, cat_idx, cat_dims):
    kx_num, kx_cat = jax.random.split(key)
    x = jax.random.normal(kx_num, (B, dim_x), jnp.float32)
    cat_keys = jax.random.split(kx_cat, len(cat_idx))
    for i, col in enumerate(cat_idx):
        ids = jax.random.randint(cat_keys[i], (B,), 0, cat_dims[i])
        x = x.at[:, col].set(ids.astype(jnp.float32))
    return x


# --------------------------------- main -------------------------------------
if __name__ == "__main__":
    # Small, module-consistent shapes
    dim_x = 10
    cat_idx = [0, 2, 5]
    cat_dims = [5, 7, 3]
    emb_size = 8
    n_hidden = 2
    dim_hidden = 32
    n_out = 6

    key = jax.random.PRNGKey(0)
    kp, kx_small, kx_big = jax.random.split(key, 3)

    params = make_params(kp, dim_x, cat_idx, cat_dims, emb_size,
                         n_hidden, dim_hidden, n_out)
    w_stack, c_stack, dims = fold_and_pad(params, n_hidden)
    forward = make_classifier_forward(dim_x=dim_x, cat_idx=cat_idx,
                                      n_hidden=n_hidden, dims=dims)

    # Tolerance is loosened vs the f32 reference because activations/weights
    # stream through the MXU in bf16 (accumulation stays f32).
    for B, kx in ((8, kx_small), (1024, kx_big)):
        x = _make_input(kx, B, dim_x, cat_idx, cat_dims)
        out = forward(x, params["emb"], w_stack, c_stack)
        jax.block_until_ready(out)
        assert out.shape == (B, n_out), out.shape

        ref = classifier_reference(x, params, dim_x=dim_x, cat_idx=cat_idx,
                                   n_hidden=n_hidden)
        jax.block_until_ready(ref)
        assert jnp.allclose(out, ref, atol=5e-2, rtol=5e-2), \
            (B, float(jnp.max(jnp.abs(out - ref))))

    print("KERNEL_OK")
</pallas_src>

<mosaic_0001>
module attributes {stable_mosaic.version = 11 : i64} {
  func.func @classifier_kernel(%arg0: i32, %arg1: memref<8x128xbf16, #tpu.memory_space<vmem>>, %arg2: memref<4x128x128xbf16, #tpu.memory_space<vmem>>, %arg3: memref<4x1x128xf32, #tpu.memory_space<vmem>>, %arg4: memref<8x128xbf16, #tpu.memory_space<vmem>>) attributes {dimension_semantics = [#tpu.dimension_semantics<parallel>], iteration_bounds = array<i64: 1>, scalar_prefetch = 0 : i64, scratch_operands = 0 : i64, tpu.core_type = #tpu.core_type<tc>, window_params = [{transform_indices = @transform_0, window_bounds = array<i64: 8, 128>}, {pipeline_mode = #tpu.pipeline_mode<synchronous>, transform_indices = @transform_1, window_bounds = array<i64: 4, 128, 128>}, {pipeline_mode = #tpu.pipeline_mode<synchronous>, transform_indices = @transform_2, window_bounds = array<i64: 4, 1, 128>}, {transform_indices = @transform_3, window_bounds = array<i64: 8, 128>}]} {
    %c0 = arith.constant 0 : index
    %c0_0 = arith.constant 0 : index
    %0 = vector.load %arg1[%c0, %c0_0] : memref<8x128xbf16, #tpu.memory_space<vmem>>, vector<8x128xbf16>
    %c0_1 = arith.constant 0 : index
    %c0_2 = arith.constant 0 : index
    %c0_3 = arith.constant 0 : index
    %1 = vector.load %arg2[%c0_1, %c0_2, %c0_3] : memref<4x128x128xbf16, #tpu.memory_space<vmem>>, vector<1x128x128xbf16>
    %2 = vector.shape_cast %1 : vector<1x128x128xbf16> to vector<128x128xbf16>
    %cst = arith.constant dense<0.000000e+00> : vector<8x128xf32>
    %3 = tpu.matmul %0, %2, %cst {dimension_numbers = #tpu.dot_dimension_numbers<[1], [0], [0], [1], [0, 0, 1, 1], [], []>} : vector<8x128xbf16>, vector<128x128xbf16>, vector<8x128xf32> -> vector<8x128xf32>
    %c0_4 = arith.constant 0 : index
    %c0_5 = arith.constant 0 : index
    %c0_6 = arith.constant 0 : index
    %4 = vector.load %arg3[%c0_4, %c0_5, %c0_6] : memref<4x1x128xf32, #tpu.memory_space<vmem>>, vector<1x1x128xf32>
    %5 = vector.shape_cast %4 : vector<1x1x128xf32> to vector<1x128xf32>
    %6 = vector.broadcast %5 : vector<1x128xf32> to vector<8x128xf32>
    %7 = arith.addf %3, %6 : vector<8x128xf32>
    %cst_7 = arith.constant 0.000000e+00 : f32
    %8 = vector.broadcast %cst_7 : f32 to vector<8x128xf32>
    %9 = arith.cmpf oge, %7, %8 : vector<8x128xf32>
    %cst_8 = arith.constant 0.00999999977 : f32
    %10 = vector.broadcast %cst_8 : f32 to vector<8x128xf32>
    %11 = arith.mulf %10, %7 : vector<8x128xf32>
    %12 = arith.select %9, %7, %11 : vector<8x128xi1>, vector<8x128xf32>
    %13 = arith.truncf %12 : vector<8x128xf32> to vector<8x128xbf16>
    %c1 = arith.constant 1 : index
    %c0_9 = arith.constant 0 : index
    %c0_10 = arith.constant 0 : index
    %14 = vector.load %arg2[%c1, %c0_9, %c0_10] : memref<4x128x128xbf16, #tpu.memory_space<vmem>>, vector<1x128x128xbf16>
    %15 = vector.shape_cast %14 : vector<1x128x128xbf16> to vector<128x128xbf16>
    %cst_11 = arith.constant dense<0.000000e+00> : vector<8x128xf32>
    %16 = tpu.matmul %13, %15, %cst_11 {dimension_numbers = #tpu.dot_dimension_numbers<[1], [0], [0], [1], [0, 0, 1, 1], [], []>} : vector<8x128xbf16>, vector<128x128xbf16>, vector<8x128xf32> -> vector<8x128xf32>
    %c1_12 = arith.constant 1 : index
    %c0_13 = arith.constant 0 : index
    %c0_14 = arith.constant 0 : index
    %17 = vector.load %arg3[%c1_12, %c0_13, %c0_14] : memref<4x1x128xf32, #tpu.memory_space<vmem>>, vector<1x1x128xf32>
    %18 = vector.shape_cast %17 : vector<1x1x128xf32> to vector<1x128xf32>
    %19 = vector.broadcast %18 : vector<1x128xf32> to vector<8x128xf32>
    %20 = arith.addf %16, %19 : vector<8x128xf32>
    %cst_15 = arith.constant 0.000000e+00 : f32
    %21 = vector.broadcast %cst_15 : f32 to vector<8x128xf32>
    %22 = arith.cmpf oge, %20, %21 : vector<8x128xf32>
    %cst_16 = arith.constant 0.00999999977 : f32
    %23 = vector.broadcast %cst_16 : f32 to vector<8x128xf32>
    %24 = arith.mulf %23, %20 : vector<8x128xf32>
    %25 = arith.select %22, %20, %24 : vector<8x128xi1>, vector<8x128xf32>
    %26 = arith.truncf %25 : vector<8x128xf32> to vector<8x128xbf16>
    %c2 = arith.constant 2 : index
    %c0_17 = arith.constant 0 : index
    %c0_18 = arith.constant 0 : index
    %27 = vector.load %arg2[%c2, %c0_17, %c0_18] : memref<4x128x128xbf16, #tpu.memory_space<vmem>>, vector<1x128x128xbf16>
    %28 = vector.shape_cast %27 : vector<1x128x128xbf16> to vector<128x128xbf16>
    %cst_19 = arith.constant dense<0.000000e+00> : vector<8x128xf32>
    %29 = tpu.matmul %26, %28, %cst_19 {dimension_numbers = #tpu.dot_dimension_numbers<[1], [0], [0], [1], [0, 0, 1, 1], [], []>} : vector<8x128xbf16>, vector<128x128xbf16>, vector<8x128xf32> -> vector<8x128xf32>
    %c2_20 = arith.constant 2 : index
    %c0_21 = arith.constant 0 : index
    %c0_22 = arith.constant 0 : index
    %30 = vector.load %arg3[%c2_20, %c0_21, %c0_22] : memref<4x1x128xf32, #tpu.memory_space<vmem>>, vector<1x1x128xf32>
    %31 = vector.shape_cast %30 : vector<1x1x128xf32> to vector<1x128xf32>
    %32 = vector.broadcast %31 : vector<1x128xf32> to vector<8x128xf32>
    %33 = arith.addf %29, %32 : vector<8x128xf32>
    %cst_23 = arith.constant 0.000000e+00 : f32
    %34 = vector.broadcast %cst_23 : f32 to vector<8x128xf32>
    %35 = arith.cmpf oge, %33, %34 : vector<8x128xf32>
    %cst_24 = arith.constant 0.00999999977 : f32
    %36 = vector.broadcast %cst_24 : f32 to vector<8x128xf32>
    %37 = arith.mulf %36, %33 : vector<8x128xf32>
    %38 = arith.select %35, %33, %37 : vector<8x128xi1>, vector<8x128xf32>
    %39 = arith.truncf %38 : vector<8x128xf32> to vector<8x128xbf16>
    %c3 = arith.constant 3 : index
    %c0_25 = arith.constant 0 : index
    %c0_26 = arith.constant 0 : index
    %40 = vector.load %arg2[%c3, %c0_25, %c0_26] : memref<4x128x128xbf16, #tpu.memory_space<vmem>>, vector<1x128x128xbf16>
    %41 = vector.shape_cast %40 : vector<1x128x128xbf16> to vector<128x128xbf16>
    %cst_27 = arith.constant dense<0.000000e+00> : vector<8x128xf32>
    %42 = tpu.matmul %39, %41, %cst_27 {dimension_numbers = #tpu.dot_dimension_numbers<[1], [0], [0], [1], [0, 0, 1, 1], [], []>} : vector<8x128xbf16>, vector<128x128xbf16>, vector<8x128xf32> -> vector<8x128xf32>
    %c3_28 = arith.constant 3 : index
    %c0_29 = arith.constant 0 : index
    %c0_30 = arith.constant 0 : index
    %43 = vector.load %arg3[%c3_28, %c0_29, %c0_30] : memref<4x1x128xf32, #tpu.memory_space<vmem>>, vector<1x1x128xf32>
    %44 = vector.shape_cast %43 : vector<1x1x128xf32> to vector<1x128xf32>
    %45 = vector.broadcast %44 : vector<1x128xf32> to vector<8x128xf32>
    %46 = arith.addf %42, %45 : vector<8x128xf32>
    %47 = arith.truncf %46 : vector<8x128xf32> to vector<8x128xbf16>
    %c0_31 = arith.constant 0 : index
    %c0_32 = arith.constant 0 : index
    %48 = vector.load %arg4[%c0_31, %c0_32] : memref<8x128xbf16, #tpu.memory_space<vmem>>, vector<8x128xbf16>
    tpu.vector_store %arg4[%c0_31, %c0_32], %47 {strides = array<i32>} : memref<8x128xbf16, #tpu.memory_space<vmem>>, vector<8x128xbf16>,
    return
  }
  func.func @transform_0(%arg0: i32) -> (i32, i32) {
    %c0_i32 = arith.constant 0 : i32
    %c0_i32_0 = arith.constant 0 : i32
    return %arg0, %c0_i32 : i32, i32
  }
  func.func @transform_1(%arg0: i32) -> (i32, i32, i32) {
    %c0_i32 = arith.constant 0 : i32
    %c0_i32_0 = arith.constant 0 : i32
    %c0_i32_1 = arith.constant 0 : i32
    %c0_i32_2 = arith.constant 0 : i32
    return %c0_i32, %c0_i32_0, %c0_i32_1 : i32, i32, i32
  }
  func.func @transform_2(%arg0: i32) -> (i32, i32, i32) {
    %c0_i32 = arith.constant 0 : i32
    %c0_i32_0 = arith.constant 0 : i32
    %c0_i32_1 = arith.constant 0 : i32
    %c0_i32_2 = arith.constant 0 : i32
    return %c0_i32, %c0_i32_0, %c0_i32_1 : i32, i32, i32
  }
  func.func @transform_3(%arg0: i32) -> (i32, i32) {
    %c0_i32 = arith.constant 0 : i32
    %c0_i32_0 = arith.constant 0 : i32
    return %arg0, %c0_i32 : i32, i32
  }
}

</mosaic_0001>

<llo_original>
// kernel: forward.1
$region0: #{forward.1}
  #allocation0 [shape = 'u32[]', space=smem, size = 0x4, offset = 0x4, fixed_abs, tag = 'smem constant byte address 0x4 - core index']
  #allocation1 [shape = 'u32[144,128]{1,0:T(1,128)}', space=vmem, size = 0x12000, scoped, tag = 'internal scratch']
  %s0 = inlined_call_operand.vmem [shape: bf16[8,128], index: 0, kind: input, shape index: {}]
  %s1 = inlined_call_operand.vmem [shape: bf16[4,128,128], index: 1, kind: input, shape index: {}]
  %s2 = inlined_call_operand.vmem [shape: f32[4,1,128], index: 2, kind: input, shape index: {}]
  %s3 = inlined_call_operand.vmem [shape: bf16[8,128], index: 3, kind: output, shape index: {}]
  %s4 = sld [smem:[#allocation0]]
  $region22: #{forward.1} parent=0
    _
  %s6 = ssub.s32 1, %s4
  %s7 = scalar_select 0, %s6, %s4
  // Predicated region
  $region2: #{forward.1} parent=0 // pred_check
    _
  $region3: #{forward.1} parent=0 // pred_check_branch
    %9 = sbr.rel (0) target = $region5
  $region4: #{forward.1} parent=0 // pred_region
    _
  $region5: #{forward.1} parent=0 // pred_fallthru
    _
  // Predicated region
  $region6: #{forward.1} parent=0 // pred_check
    _
  $region7: #{forward.1} parent=0 // pred_check_branch
    %11 = sbr.rel (0) target = $region9
  $region8: #{forward.1} parent=0 // pred_region
    _
  $region9: #{forward.1} parent=0 // pred_fallthru
    _
  // Predicated region
  $region10: #{forward.1} parent=0 // pred_check
    _
  $region11: #{forward.1} parent=0 // pred_check_branch
    %13 = sbr.rel (0) target = $region13
  $region12: #{forward.1} parent=0 // pred_region
    _
  $region13: #{forward.1} parent=0 // pred_fallthru
    _
  %v15 = vld [vmem:[%s0] sm:$0xf]
  %v16 = vld [vmem:[%s1] sm:$0xf]
  %v17 = vld [vmem:[%s1 + $0x4] sm:$0xf]
  %v18 = vld [vmem:[%s1 + $0x8] sm:$0xf]
  %v19 = vld [vmem:[%s1 + $0xc] sm:$0xf]
  %v20 = vld [vmem:[%s1 + $0x10] sm:$0xf]
  %v21 = vld [vmem:[%s1 + $0x14] sm:$0xf]
  %v22 = vld [vmem:[%s1 + $0x18] sm:$0xf]
  %v23 = vld [vmem:[%s1 + $0x1c] sm:$0xf]
  %v24 = vld [vmem:[%s1 + $0x20] sm:$0xf]
  %v25 = vld [vmem:[%s1 + $0x24] sm:$0xf]
  %v26 = vld [vmem:[%s1 + $0x28] sm:$0xf]
  %v27 = vld [vmem:[%s1 + $0x2c] sm:$0xf]
  %v28 = vld [vmem:[%s1 + $0x30] sm:$0xf]
  %v29 = vld [vmem:[%s1 + $0x34] sm:$0xf]
  %v30 = vld [vmem:[%s1 + $0x38] sm:$0xf]
  %v31 = vld [vmem:[%s1 + $0x3c] sm:$0xf]
  %v32 = vld [vmem:[%s2] sm:$0x1]
  %v34 = vlaneseq
  %v35 = vshrl.u32 %v34, 7
  %v36 = vsub.s32 0, %v35
  %v37 = vrot.slane %v32, %v36
  %v55 = vunpack.c.l.b16 %v16
  %v56 = vunpack.c.l.b16 %v17
  %v57 = vunpack.c.l.b16 %v18
  %v58 = vunpack.c.l.b16 %v19
  %v59 = vunpack.c.l.b16 %v20
  %v60 = vunpack.c.l.b16 %v21
  %v61 = vunpack.c.l.b16 %v22
  %v62 = vunpack.c.l.b16 %v23
  %v63 = vunpack.c.l.b16 %v24
  %v64 = vunpack.c.l.b16 %v25
  %v65 = vunpack.c.l.b16 %v26
  %v66 = vunpack.c.l.b16 %v27
  %v67 = vunpack.c.l.b16 %v28
  %v68 = vunpack.c.l.b16 %v29
  %v69 = vunpack.c.l.b16 %v30
  %v70 = vunpack.c.l.b16 %v31
  %v71 = vpack.c.b16 %v56, %v55
  %v72 = vpack.c.b16 %v58, %v57
  %v73 = vpack.c.b16 %v60, %v59
  %v74 = vpack.c.b16 %v62, %v61
  %v75 = vpack.c.b16 %v64, %v63
  %v76 = vpack.c.b16 %v66, %v65
  %v77 = vpack.c.b16 %v68, %v67
  %v78 = vpack.c.b16 %v70, %v69
  %87 = vmatprep.subr.bf16.mxu0 0
  %88 = vmatpush1.bf16.msra.mxu0 %v78
  %89 = vmatprep.subr.bf16.mxu0 0
  %90 = vmatpush1.bf16.msra.mxu0 %v77
  %91 = vmatprep.subr.bf16.mxu0 0
  %92 = vmatpush1.bf16.msra.mxu0 %v76
  %93 = vmatprep.subr.bf16.mxu0 0
  %94 = vmatpush1.bf16.msra.mxu0 %v75
  %95 = vmatprep.subr.bf16.mxu0 0
  %96 = vmatpush1.bf16.msra.mxu0 %v74
  %97 = vmatprep.subr.bf16.mxu0 0
  %98 = vmatpush1.bf16.msra.mxu0 %v73
  %99 = vmatprep.subr.bf16.mxu0 0
  %100 = vmatpush1.bf16.msra.mxu0 %v72
  %101 = vmatprep.subr.bf16.mxu0 0
  %102 = vmatpush1.bf16.msra.mxu0 %v71
  %103 = vmatprep.subr.bf16.mxu0 0
  %104 = vmatpush2.bf16.msra.mxu0 0
  %105 = vmatprep.subr.bf16.mxu0 0
  %106 = vmatpush2.bf16.msra.mxu0 0
  %107 = vmatprep.subr.bf16.mxu0 0
  %108 = vmatpush2.bf16.msra.mxu0 0
  %109 = vmatprep.subr.bf16.mxu0 0
  %110 = vmatpush2.bf16.msra.mxu0 0
  %111 = vmatprep.subr.bf16.mxu0 0
  %112 = vmatpush2.bf16.msra.mxu0 0
  %113 = vmatprep.subr.bf16.mxu0 0
  %114 = vmatpush2.bf16.msra.mxu0 0
  %115 = vmatprep.subr.bf16.mxu0 0
  %116 = vmatpush2.bf16.msra.mxu0 0
  %117 = vmatprep.subr.bf16.mxu0 0
  %118 = vmatpush2.bf16.msra.mxu0 0
  %119 = vmatprep.mubr.bf16.mxu0 0
  %120 = vmatmul.mubr.bf16.gmra.mxu0 %v15
  %v121 = vpop.f32.mrf.mxu0
  %v122 = vadd.f32 %v37, %v121
  %v123 = vpop.f32.mrf.mxu0
  %v124 = vpop.f32.mrf.mxu0
  %v125 = vpop.f32.mrf.mxu0
  %126 = vdwg.mxu0
  %vm127 = vcmp.ge.f32.partialorder %v122, 0.0
  %v128 = vmul.f32 %v122, 0.01
  %v129 = vsel %vm127, %v122, %v128
  %v130 = vpack.c.bf16 %v129, %v129
  %s131 = scalar_lea.vmem %s1, 64
  %v132 = vld [vmem:[%s131] sm:$0xf]
  %v133 = vld [vmem:[%s131 + $0x4] sm:$0xf]
  %v134 = vld [vmem:[%s131 + $0x8] sm:$0xf]
  %v135 = vld [vmem:[%s131 + $0xc] sm:$0xf]
  %v136 = vld [vmem:[%s131 + $0x10] sm:$0xf]
  %v137 = vld [vmem:[%s131 + $0x14] sm:$0xf]
  %v138 = vld [vmem:[%s131 + $0x18] sm:$0xf]
  %v139 = vld [vmem:[%s131 + $0x1c] sm:$0xf]
  %v140 = vld [vmem:[%s131 + $0x20] sm:$0xf]
  %v141 = vld [vmem:[%s131 + $0x24] sm:$0xf]
  %v142 = vld [vmem:[%s131 + $0x28] sm:$0xf]
  %v143 = vld [vmem:[%s131 + $0x2c] sm:$0xf]
  %v144 = vld [vmem:[%s131 + $0x30] sm:$0xf]
  %v145 = vld [vmem:[%s131 + $0x34] sm:$0xf]
  %v146 = vld [vmem:[%s131 + $0x38] sm:$0xf]
  %v147 = vld [vmem:[%s131 + $0x3c] sm:$0xf]
  %s148 = scalar_lea.vmem %s2, 1
  %v149 = vld [vmem:[%s148] sm:$0x1]
  %v151 = vlaneseq
  %v152 = vshrl.u32 %v151, 7
  %v153 = vsub.s32 0, %v152
  %v154 = vrot.slane %v149, %v153
  %v172 = vunpack.c.l.b16 %v132
  %v173 = vunpack.c.l.b16 %v133
  %v174 = vunpack.c.l.b16 %v134
  %v175 = vunpack.c.l.b16 %v135
  %v176 = vunpack.c.l.b16 %v136
  %v177 = vunpack.c.l.b16 %v137
  %v178 = vunpack.c.l.b16 %v138
  %v179 = vunpack.c.l.b16 %v139
  %v180 = vunpack.c.l.b16 %v140
  %v181 = vunpack.c.l.b16 %v141
  %v182 = vunpack.c.l.b16 %v142
  %v183 = vunpack.c.l.b16 %v143
  %v184 = vunpack.c.l.b16 %v144
  %v185 = vunpack.c.l.b16 %v145
  %v186 = vunpack.c.l.b16 %v146
  %v187 = vunpack.c.l.b16 %v147
  %v188 = vpack.c.b16 %v173, %v172
  %v189 = vpack.c.b16 %v175, %v174
  %v190 = vpack.c.b16 %v177, %v176
  %v191 = vpack.c.b16 %v179, %v178
  %v192 = vpack.c.b16 %v181, %v180
  %v193 = vpack.c.b16 %v183, %v182
  %v194 = vpack.c.b16 %v185, %v184
  %v195 = vpack.c.b16 %v187, %v186
  %204 = vmatprep.subr.bf16.mxu0 0
  %205 = vmatpush1.bf16.msra.mxu0 %v195
  %206 = vmatprep.subr.bf16.mxu0 0
  %207 = vmatpush1.bf16.msra.mxu0 %v194
  %208 = vmatprep.subr.bf16.mxu0 0
  %209 = vmatpush1.bf16.msra.mxu0 %v193
  %210 = vmatprep.subr.bf16.mxu0 0
  %211 = vmatpush1.bf16.msra.mxu0 %v192
  %212 = vmatprep.subr.bf16.mxu0 0
  %213 = vmatpush1.bf16.msra.mxu0 %v191
  %214 = vmatprep.subr.bf16.mxu0 0
  %215 = vmatpush1.bf16.msra.mxu0 %v190
  %216 = vmatprep.subr.bf16.mxu0 0
  %217 = vmatpush1.bf16.msra.mxu0 %v189
  %218 = vmatprep.subr.bf16.mxu0 0
  %219 = vmatpush1.bf16.msra.mxu0 %v188
  %220 = vmatprep.subr.bf16.mxu0 0
  %221 = vmatpush2.bf16.msra.mxu0 0
  %222 = vmatprep.subr.bf16.mxu0 0
  %223 = vmatpush2.bf16.msra.mxu0 0
  %224 = vmatprep.subr.bf16.mxu0 0
  %225 = vmatpush2.bf16.msra.mxu0 0
  %226 = vmatprep.subr.bf16.mxu0 0
  %227 = vmatpush2.bf16.msra.mxu0 0
  %228 = vmatprep.subr.bf16.mxu0 0
  %229 = vmatpush2.bf16.msra.mxu0 0
  %230 = vmatprep.subr.bf16.mxu0 0
  %231 = vmatpush2.bf16.msra.mxu0 0
  %232 = vmatprep.subr.bf16.mxu0 0
  %233 = vmatpush2.bf16.msra.mxu0 0
  %234 = vmatprep.subr.bf16.mxu0 0
  %235 = vmatpush2.bf16.msra.mxu0 0
  %236 = vmatprep.mubr.bf16.mxu0 0
  %237 = vmatmul.mubr.bf16.gmra.mxu0 %v130
  %v238 = vpop.f32.mrf.mxu0
  %v239 = vadd.f32 %v154, %v238
  %v240 = vpop.f32.mrf.mxu0
  %v241 = vpop.f32.mrf.mxu0
  %v242 = vpop.f32.mrf.mxu0
  %243 = vdwg.mxu0
  %vm244 = vcmp.ge.f32.partialorder %v239, 0.0
  %v245 = vmul.f32 %v239, 0.01
  %v246 = vsel %vm244, %v239, %v245
  %v247 = vpack.c.bf16 %v246, %v246
  %s248 = scalar_lea.vmem %s1, 128
  %v249 = vld [vmem:[%s248] sm:$0xf]
  %v250 = vld [vmem:[%s248 + $0x4] sm:$0xf]
  %v251 = vld [vmem:[%s248 + $0x8] sm:$0xf]
  %v252 = vld [vmem:[%s248 + $0xc] sm:$0xf]
  %v253 = vld [vmem:[%s248 + $0x10] sm:$0xf]
  %v254 = vld [vmem:[%s248 + $0x14] sm:$0xf]
  %v255 = vld [vmem:[%s248 + $0x18] sm:$0xf]
  %v256 = vld [vmem:[%s248 + $0x1c] sm:$0xf]
  %v257 = vld [vmem:[%s248 + $0x20] sm:$0xf]
  %v258 = vld [vmem:[%s248 + $0x24] sm:$0xf]
  %v259 = vld [vmem:[%s248 + $0x28] sm:$0xf]
  %v260 = vld [vmem:[%s248 + $0x2c] sm:$0xf]
  %v261 = vld [vmem:[%s248 + $0x30] sm:$0xf]
  %v262 = vld [vmem:[%s248 + $0x34] sm:$0xf]
  %v263 = vld [vmem:[%s248 + $0x38] sm:$0xf]
  %v264 = vld [vmem:[%s248 + $0x3c] sm:$0xf]
  %s265 = scalar_lea.vmem %s2, 2
  %v266 = vld [vmem:[%s265] sm:$0x1]
  %v268 = vlaneseq
  %v269 = vshrl.u32 %v268, 7
  %v270 = vsub.s32 0, %v269
  %v271 = vrot.slane %v266, %v270
  %v289 = vunpack.c.l.b16 %v249
  %v290 = vunpack.c.l.b16 %v250
  %v291 = vunpack.c.l.b16 %v251
  %v292 = vunpack.c.l.b16 %v252
  %v293 = vunpack.c.l.b16 %v253
  %v294 = vunpack.c.l.b16 %v254
  %v295 = vunpack.c.l.b16 %v255
  %v296 = vunpack.c.l.b16 %v256
  %v297 = vunpack.c.l.b16 %v257
  %v298 = vunpack.c.l.b16 %v258
  %v299 = vunpack.c.l.b16 %v259
  %v300 = vunpack.c.l.b16 %v260
  %v301 = vunpack.c.l.b16 %v261
  %v302 = vunpack.c.l.b16 %v262
  %v303 = vunpack.c.l.b16 %v263
  %v304 = vunpack.c.l.b16 %v264
  %v305 = vpack.c.b16 %v290, %v289
  %v306 = vpack.c.b16 %v292, %v291
  %v307 = vpack.c.b16 %v294, %v293
  %v308 = vpack.c.b16 %v296, %v295
  %v309 = vpack.c.b16 %v298, %v297
  %v310 = vpack.c.b16 %v300, %v299
  %v311 = vpack.c.b16 %v302, %v301
  %v312 = vpack.c.b16 %v304, %v303
  %321 = vmatprep.subr.bf16.mxu0 0
  %322 = vmatpush1.bf16.msra.mxu0 %v312
  %323 = vmatprep.subr.bf16.mxu0 0
  %324 = vmatpush1.bf16.msra.mxu0 %v311
  %325 = vmatprep.subr.bf16.mxu0 0
  %326 = vmatpush1.bf16.msra.mxu0 %v310
  %327 = vmatprep.subr.bf16.mxu0 0
  %328 = vmatpush1.bf16.msra.mxu0 %v309
  %329 = vmatprep.subr.bf16.mxu0 0
  %330 = vmatpush1.bf16.msra.mxu0 %v308
  %331 = vmatprep.subr.bf16.mxu0 0
  %332 = vmatpush1.bf16.msra.mxu0 %v307
  %333 = vmatprep.subr.bf16.mxu0 0
  %334 = vmatpush1.bf16.msra.mxu0 %v306
  %335 = vmatprep.subr.bf16.mxu0 0
  %336 = vmatpush1.bf16.msra.mxu0 %v305
  %337 = vmatprep.subr.bf16.mxu0 0
  %338 = vmatpush2.bf16.msra.mxu0 0
  %339 = vmatprep.subr.bf16.mxu0 0
  %340 = vmatpush2.bf16.msra.mxu0 0
  %341 = vmatprep.subr.bf16.mxu0 0
  %342 = vmatpush2.bf16.msra.mxu0 0
  %343 = vmatprep.subr.bf16.mxu0 0
  %344 = vmatpush2.bf16.msra.mxu0 0
  %345 = vmatprep.subr.bf16.mxu0 0
  %346 = vmatpush2.bf16.msra.mxu0 0
  %347 = vmatprep.subr.bf16.mxu0 0
  %348 = vmatpush2.bf16.msra.mxu0 0
  %349 = vmatprep.subr.bf16.mxu0 0
  %350 = vmatpush2.bf16.msra.mxu0 0
  %351 = vmatprep.subr.bf16.mxu0 0
  %352 = vmatpush2.bf16.msra.mxu0 0
  %353 = vmatprep.mubr.bf16.mxu0 0
  %354 = vmatmul.mubr.bf16.gmra.mxu0 %v247
  %v355 = vpop.f32.mrf.mxu0
  %v356 = vadd.f32 %v271, %v355
  %v357 = vpop.f32.mrf.mxu0
  %v358 = vpop.f32.mrf.mxu0
  %v359 = vpop.f32.mrf.mxu0
  %360 = vdwg.mxu0
  %vm361 = vcmp.ge.f32.partialorder %v356, 0.0
  %v362 = vmul.f32 %v356, 0.01
  %v363 = vsel %vm361, %v356, %v362
  %v364 = vpack.c.bf16 %v363, %v363
  %s365 = scalar_lea.vmem %s1, 192
  %v366 = vld [vmem:[%s365] sm:$0xf]
  %v367 = vld [vmem:[%s365 + $0x4] sm:$0xf]
  %v368 = vld [vmem:[%s365 + $0x8] sm:$0xf]
  %v369 = vld [vmem:[%s365 + $0xc] sm:$0xf]
  %v370 = vld [vmem:[%s365 + $0x10] sm:$0xf]
  %v371 = vld [vmem:[%s365 + $0x14] sm:$0xf]
  %v372 = vld [vmem:[%s365 + $0x18] sm:$0xf]
  %v373 = vld [vmem:[%s365 + $0x1c] sm:$0xf]
  %v374 = vld [vmem:[%s365 + $0x20] sm:$0xf]
  %v375 = vld [vmem:[%s365 + $0x24] sm:$0xf]
  %v376 = vld [vmem:[%s365 + $0x28] sm:$0xf]
  %v377 = vld [vmem:[%s365 + $0x2c] sm:$0xf]
  %v378 = vld [vmem:[%s365 + $0x30] sm:$0xf]
  %v379 = vld [vmem:[%s365 + $0x34] sm:$0xf]
  %v380 = vld [vmem:[%s365 + $0x38] sm:$0xf]
  %v381 = vld [vmem:[%s365 + $0x3c] sm:$0xf]
  %s382 = scalar_lea.vmem %s2, 3
  %v383 = vld [vmem:[%s382] sm:$0x1]
  %v385 = vlaneseq
  %v386 = vshrl.u32 %v385, 7
  %v387 = vsub.s32 0, %v386
  %v388 = vrot.slane %v383, %v387
  %v406 = vunpack.c.l.b16 %v366
  %v407 = vunpack.c.l.b16 %v367
  %v408 = vunpack.c.l.b16 %v368
  %v409 = vunpack.c.l.b16 %v369
  %v410 = vunpack.c.l.b16 %v370
  %v411 = vunpack.c.l.b16 %v371
  %v412 = vunpack.c.l.b16 %v372
  %v413 = vunpack.c.l.b16 %v373
  %v414 = vunpack.c.l.b16 %v374
  %v415 = vunpack.c.l.b16 %v375
  %v416 = vunpack.c.l.b16 %v376
  %v417 = vunpack.c.l.b16 %v377
  %v418 = vunpack.c.l.b16 %v378
  %v419 = vunpack.c.l.b16 %v379
  %v420 = vunpack.c.l.b16 %v380
  %v421 = vunpack.c.l.b16 %v381
  %v422 = vpack.c.b16 %v407, %v406
  %v423 = vpack.c.b16 %v409, %v408
  %v424 = vpack.c.b16 %v411, %v410
  %v425 = vpack.c.b16 %v413, %v412
  %v426 = vpack.c.b16 %v415, %v414
  %v427 = vpack.c.b16 %v417, %v416
  %v428 = vpack.c.b16 %v419, %v418
  %v429 = vpack.c.b16 %v421, %v420
  %438 = vmatprep.subr.bf16.mxu0 0
  %439 = vmatpush1.bf16.msra.mxu0 %v429
  %440 = vmatprep.subr.bf16.mxu0 0
  %441 = vmatpush1.bf16.msra.mxu0 %v428
  %442 = vmatprep.subr.bf16.mxu0 0
  %443 = vmatpush1.bf16.msra.mxu0 %v427
  %444 = vmatprep.subr.bf16.mxu0 0
  %445 = vmatpush1.bf16.msra.mxu0 %v426
  %446 = vmatprep.subr.bf16.mxu0 0
  %447 = vmatpush1.bf16.msra.mxu0 %v425
  %448 = vmatprep.subr.bf16.mxu0 0
  %449 = vmatpush1.bf16.msra.mxu0 %v424
  %450 = vmatprep.subr.bf16.mxu0 0
  %451 = vmatpush1.bf16.msra.mxu0 %v423
  %452 = vmatprep.subr.bf16.mxu0 0
  %453 = vmatpush1.bf16.msra.mxu0 %v422
  %454 = vmatprep.subr.bf16.mxu0 0
  %455 = vmatpush2.bf16.msra.mxu0 0
  %456 = vmatprep.subr.bf16.mxu0 0
  %457 = vmatpush2.bf16.msra.mxu0 0
  %458 = vmatprep.subr.bf16.mxu0 0
  %459 = vmatpush2.bf16.msra.mxu0 0
  %460 = vmatprep.subr.bf16.mxu0 0
  %461 = vmatpush2.bf16.msra.mxu0 0
  %462 = vmatprep.subr.bf16.mxu0 0
  %463 = vmatpush2.bf16.msra.mxu0 0
  %464 = vmatprep.subr.bf16.mxu0 0
  %465 = vmatpush2.bf16.msra.mxu0 0
  %466 = vmatprep.subr.bf16.mxu0 0
  %467 = vmatpush2.bf16.msra.mxu0 0
  %468 = vmatprep.subr.bf16.mxu0 0
  %469 = vmatpush2.bf16.msra.mxu0 0
  %470 = vmatprep.mubr.bf16.mxu0 0
  %471 = vmatmul.mubr.bf16.gmra.mxu0 %v364
  %v472 = vpop.f32.mrf.mxu0
  %v473 = vadd.f32 %v388, %v472
  %v474 = vpop.f32.mrf.mxu0
  %v475 = vpop.f32.mrf.mxu0
  %v476 = vpop.f32.mrf.mxu0
  %477 = vdwg.mxu0
  %v478 = vpack.c.bf16 %v473, %v473
  %479 = vst [vmem:[%s3] sm:$0xf] %v478
  // Predicated region
  $region14: #{forward.1} parent=0 // pred_check
    _
  $region15: #{forward.1} parent=0 // pred_check_branch
    %481 = sbr.rel (0) target = $region17
  $region16: #{forward.1} parent=0 // pred_region
    _
  $region17: #{forward.1} parent=0 // pred_fallthru
    _
  // Predicated region
  $region18: #{forward.1} parent=0 // pred_check
    _
  $region19: #{forward.1} parent=0 // pred_check_branch
    %483 = sbr.rel (0) target = $region21
  $region20: #{forward.1} parent=0 // pred_region
    _
  $region21: #{forward.1} parent=0 // pred_fallthru
    _

</llo_original>
